<compile_context>
chip_gen: v7x
topology: tpu7x:2x2x1
jax: 0.10.0
libtpu: 0.0.40
codegen_flags: <defaults>
</compile_context>

<pallas_src>
import functools

import jax
import jax.numpy as jnp
from jax.experimental import pallas as pl
from jax.experimental.pallas import tpu as pltpu


def _round_up(n, m):
    return ((n + m - 1) // m) * m


def _actor_kernel(x_ref, w1_ref, b1_ref, w2_ref, b2_ref, w3_ref, b3_ref,
                  o_ref, *, alpha, beta):
    # In-kernel bf16 cast of the activation tile (rides a free VPU slot).
    x = x_ref[...].astype(jnp.bfloat16)

    # Layer 1: Linear(state_dim -> 512pad) + ReLU  (bf16 operands, f32 accum)
    h1 = jnp.dot(x, w1_ref[...], preferred_element_type=jnp.float32)
    h1 = jnp.maximum(h1 + b1_ref[...], 0.0)

    # Layer 2: Linear(512pad -> 384pad) + ReLU
    h2 = jnp.dot(h1.astype(jnp.bfloat16), w2_ref[...],
                 preferred_element_type=jnp.float32)
    h2 = jnp.maximum(h2 + b2_ref[...], 0.0)

    # Layer 3: Linear(384pad -> action_dim), f32 weights (tiny), tanh + affine.
    a = jnp.dot(h2, w3_ref[...], preferred_element_type=jnp.float32)
    o_ref[...] = alpha * jnp.tanh(a + b3_ref[...]) + beta


def prepare_actor_params(params):
    """One-time kernel-friendly packing of raw f32 params.

    Casts layer-1/2 weights to bf16, zero-pads hidden dims to lane/MXU
    multiples (400->512, 300->384). ReLU keeps the padded activations at
    exactly 0, so the forward result is unchanged. Call once; reuse across
    every actor_forward call.
    """
    w1, b1, w2, b2, w3, b3 = params
    state_dim, h1 = w1.shape
    h2, action_dim = w3.shape
    h1p = _round_up(h1, 128)   # 400 -> 512
    h2p = _round_up(h2, 128)   # 300 -> 384

    w1p = jnp.zeros((state_dim, h1p), jnp.bfloat16).at[:, :h1].set(
        w1.astype(jnp.bfloat16))
    b1p = jnp.zeros((1, h1p), jnp.float32).at[:, :h1].set(
        b1.reshape(1, -1).astype(jnp.float32))
    w2p = jnp.zeros((h1p, h2p), jnp.bfloat16).at[:h1, :h2].set(
        w2.astype(jnp.bfloat16))
    b2p = jnp.zeros((1, h2p), jnp.float32).at[:, :h2].set(
        b2.reshape(1, -1).astype(jnp.float32))
    # Final layer stays f32 (only h2p x action_dim) for tighter action error.
    w3p = jnp.zeros((h2p, action_dim), jnp.float32).at[:h2, :].set(
        w3.astype(jnp.float32))
    b3p = b3.reshape(1, -1).astype(jnp.float32)
    return (w1p, b1p, w2p, b2p, w3p, b3p)


def _pick_tb(B):
    """Batch tile: big tiles for throughput, >=2 grid steps so v7x megacore
    can shard the 'parallel' batch axis across both TensorCores."""
    if B <= 16:
        return B                       # single block == full array dims
    return min(512, _round_up((B + 1) // 2, 16))


def actor_forward(x, prepared_params, max_action, min_action):
    """Fused 3-layer MLP forward.

    x: (B, state_dim) f32.  prepared_params: from prepare_actor_params().
    Returns (B, action_dim) f32.
    """
    w1p, b1p, w2p, b2p, w3p, b3p = prepared_params
    B, state_dim = x.shape
    action_dim = w3p.shape[1]

    TB = _pick_tb(B)
    grid = (pl.cdiv(B, TB),)           # ragged last block handled by Pallas

    alpha = 0.5 * (float(max_action) - float(min_action))
    beta = alpha + float(min_action)
    kernel = functools.partial(_actor_kernel, alpha=alpha, beta=beta)

    def pinned(arr):
        # Weights/biases: block index never changes -> resident in VMEM.
        return pl.BlockSpec(arr.shape, lambda i: (0,) * arr.ndim)

    out = pl.pallas_call(
        kernel,
        out_shape=jax.ShapeDtypeStruct((B, action_dim), jnp.float32),
        grid=grid,
        in_specs=[
            pl.BlockSpec((TB, state_dim), lambda i: (i, 0)),   # x tile streams
            pinned(w1p), pinned(b1p),
            pinned(w2p), pinned(b2p),
            pinned(w3p), pinned(b3p),
        ],
        # Unpadded output: masked stores are a few bundles per tile, but HBM
        # writeback bytes drop ~32x vs. a 128-padded buffer and no slice pass.
        out_specs=pl.BlockSpec((TB, action_dim), lambda i: (i, 0)),
        compiler_params=pltpu.CompilerParams(
            dimension_semantics=("parallel",)),
    )(x, w1p, b1p, w2p, b2p, w3p, b3p)
    return out


def init_actor_params(key, state_dim, action_dim):
    """Deterministic synthetic parameters (PyTorch Linear init style), f32."""
    ks = jax.random.split(key, 6)

    def linear(kw, kb, fan_in, fan_out):
        bound = 1.0 / jnp.sqrt(jnp.float32(fan_in))
        w = jax.random.uniform(kw, (fan_in, fan_out), jnp.float32, -bound, bound)
        b = jax.random.uniform(kb, (1, fan_out), jnp.float32, -bound, bound)
        return w, b

    w1, b1 = linear(ks[0], ks[1], state_dim, 400)
    w2, b2 = linear(ks[2], ks[3], 400, 300)
    w3, b3 = linear(ks[4], ks[5], 300, action_dim)
    return (w1, b1, w2, b2, w3, b3)


def actor_forward_ref(x, params, max_action, min_action):
    """Plain-JAX f32 reference for correctness checking."""
    w1, b1, w2, b2, w3, b3 = params
    h = jnp.maximum(x @ w1 + b1, 0.0)
    h = jnp.maximum(h @ w2 + b2, 0.0)
    a = jnp.tanh(h @ w3 + b3)
    return (max_action - min_action) * (a + 1.0) / 2.0 + min_action


if __name__ == "__main__":
    key = jax.random.PRNGKey(0)
    k_x, k_p = jax.random.split(key)

    batch = 8
    state_dim = 16
    action_dim = 4
    max_action = 2.0
    min_action = -2.0

    x = jax.random.normal(k_x, (batch, state_dim), jnp.float32)
    raw_params = init_actor_params(k_p, state_dim, action_dim)

    # One-time weight prep (hoisted out of the per-call path).
    prepared = jax.tree_util.tree_map(jax.block_until_ready,
                                      prepare_actor_params(raw_params))

    out = actor_forward(x, prepared, max_action, min_action)
    out = jax.block_until_ready(out)

    ref = actor_forward_ref(x, raw_params, max_action, min_action)
    assert out.shape == (batch, action_dim)
    # bf16 matmul operands in layers 1-2 (f32 accumulation, f32 final layer).
    assert jnp.allclose(out, ref, atol=5e-2, rtol=5e-2), "mismatch vs reference"
    assert bool(jnp.all(out <= max_action + 1e-5))
    assert bool(jnp.all(out >= min_action - 1e-5))

    print("KERNEL_OK")
</pallas_src>

<mosaic_0001>
module attributes {stable_mosaic.version = 11 : i64} {
  func.func @_actor_kernel(%arg0: i32, %arg1: memref<8x16xf32, #tpu.memory_space<vmem>>, %arg2: memref<16x512xbf16, #tpu.memory_space<vmem>>, %arg3: memref<1x512xf32, #tpu.memory_space<vmem>>, %arg4: memref<512x384xbf16, #tpu.memory_space<vmem>>, %arg5: memref<1x384xf32, #tpu.memory_space<vmem>>, %arg6: memref<384x4xf32, #tpu.memory_space<vmem>>, %arg7: memref<1x4xf32, #tpu.memory_space<vmem>>, %arg8: memref<8x4xf32, #tpu.memory_space<vmem>>) attributes {dimension_semantics = [#tpu.dimension_semantics<parallel>], iteration_bounds = array<i64: 1>, scalar_prefetch = 0 : i64, scratch_operands = 0 : i64, tpu.core_type = #tpu.core_type<tc>, window_params = [{transform_indices = @transform_0, window_bounds = array<i64: 8, 16>}, {pipeline_mode = #tpu.pipeline_mode<synchronous>, transform_indices = @transform_1, window_bounds = array<i64: 16, 512>}, {pipeline_mode = #tpu.pipeline_mode<synchronous>, transform_indices = @transform_2, window_bounds = array<i64: 1, 512>}, {pipeline_mode = #tpu.pipeline_mode<synchronous>, transform_indices = @transform_3, window_bounds = array<i64: 512, 384>}, {pipeline_mode = #tpu.pipeline_mode<synchronous>, transform_indices = @transform_4, window_bounds = array<i64: 1, 384>}, {pipeline_mode = #tpu.pipeline_mode<synchronous>, transform_indices = @transform_5, window_bounds = array<i64: 384, 4>}, {pipeline_mode = #tpu.pipeline_mode<synchronous>, transform_indices = @transform_6, window_bounds = array<i64: 1, 4>}, {transform_indices = @transform_7, window_bounds = array<i64: 8, 4>}]} {
    %c0 = arith.constant 0 : index
    %c0_0 = arith.constant 0 : index
    %0 = vector.load %arg1[%c0, %c0_0] : memref<8x16xf32, #tpu.memory_space<vmem>>, vector<8x16xf32>
    %1 = arith.truncf %0 : vector<8x16xf32> to vector<8x16xbf16>
    %c0_1 = arith.constant 0 : index
    %c0_2 = arith.constant 0 : index
    %2 = vector.load %arg2[%c0_1, %c0_2] : memref<16x512xbf16, #tpu.memory_space<vmem>>, vector<16x512xbf16>
    %cst = arith.constant dense<0.000000e+00> : vector<8x512xf32>
    %3 = tpu.matmul %1, %2, %cst {dimension_numbers = #tpu.dot_dimension_numbers<[1], [0], [0], [1], [0, 0, 1, 1], [], []>} : vector<8x16xbf16>, vector<16x512xbf16>, vector<8x512xf32> -> vector<8x512xf32>
    %c0_3 = arith.constant 0 : index
    %c0_4 = arith.constant 0 : index
    %4 = vector.load %arg3[%c0_3, %c0_4] : memref<1x512xf32, #tpu.memory_space<vmem>>, vector<1x512xf32>
    %5 = vector.broadcast %4 : vector<1x512xf32> to vector<8x512xf32>
    %6 = arith.addf %3, %5 : vector<8x512xf32>
    %cst_5 = arith.constant 0.000000e+00 : f32
    %7 = vector.broadcast %cst_5 : f32 to vector<8x512xf32>
    %8 = arith.maximumf %6, %7 : vector<8x512xf32>
    %9 = arith.truncf %8 : vector<8x512xf32> to vector<8x512xbf16>
    %c0_6 = arith.constant 0 : index
    %c0_7 = arith.constant 0 : index
    %10 = vector.load %arg4[%c0_6, %c0_7] : memref<512x384xbf16, #tpu.memory_space<vmem>>, vector<512x384xbf16>
    %cst_8 = arith.constant dense<0.000000e+00> : vector<8x384xf32>
    %11 = tpu.matmul %9, %10, %cst_8 {dimension_numbers = #tpu.dot_dimension_numbers<[1], [0], [0], [1], [0, 0, 1, 1], [], []>} : vector<8x512xbf16>, vector<512x384xbf16>, vector<8x384xf32> -> vector<8x384xf32>
    %c0_9 = arith.constant 0 : index
    %c0_10 = arith.constant 0 : index
    %12 = vector.load %arg5[%c0_9, %c0_10] : memref<1x384xf32, #tpu.memory_space<vmem>>, vector<1x384xf32>
    %13 = vector.broadcast %12 : vector<1x384xf32> to vector<8x384xf32>
    %14 = arith.addf %11, %13 : vector<8x384xf32>
    %cst_11 = arith.constant 0.000000e+00 : f32
    %15 = vector.broadcast %cst_11 : f32 to vector<8x384xf32>
    %16 = arith.maximumf %14, %15 : vector<8x384xf32>
    %c0_12 = arith.constant 0 : index
    %c0_13 = arith.constant 0 : index
    %17 = vector.load %arg6[%c0_12, %c0_13] : memref<384x4xf32, #tpu.memory_space<vmem>>, vector<384x4xf32>
    %cst_14 = arith.constant dense<0.000000e+00> : vector<8x4xf32>
    %18 = tpu.matmul %16, %17, %cst_14 {dimension_numbers = #tpu.dot_dimension_numbers<[1], [0], [0], [1], [0, 0, 1, 1], [], []>} : vector<8x384xf32>, vector<384x4xf32>, vector<8x4xf32> -> vector<8x4xf32>
    %c0_15 = arith.constant 0 : index
    %c0_16 = arith.constant 0 : index
    %19 = vector.load %arg7[%c0_15, %c0_16] : memref<1x4xf32, #tpu.memory_space<vmem>>, vector<1x4xf32>
    %20 = vector.broadcast %19 : vector<1x4xf32> to vector<8x4xf32>
    %21 = arith.addf %18, %20 : vector<8x4xf32>
    %22 = math.tanh %21 : vector<8x4xf32>
    %cst_17 = arith.constant 2.000000e+00 : f32
    %23 = vector.broadcast %cst_17 : f32 to vector<8x4xf32>
    %24 = arith.mulf %23, %22 : vector<8x4xf32>
    %cst_18 = arith.constant 0.000000e+00 : f32
    %25 = vector.broadcast %cst_18 : f32 to vector<8x4xf32>
    %26 = arith.addf %24, %25 : vector<8x4xf32>
    %c0_19 = arith.constant 0 : index
    %c0_20 = arith.constant 0 : index
    %27 = vector.load %arg8[%c0_19, %c0_20] : memref<8x4xf32, #tpu.memory_space<vmem>>, vector<8x4xf32>
    tpu.vector_store %arg8[%c0_19, %c0_20], %26 {strides = array<i32>} : memref<8x4xf32, #tpu.memory_space<vmem>>, vector<8x4xf32>,
    return
  }
  func.func @transform_0(%arg0: i32) -> (i32, i32) {
    %c0_i32 = arith.constant 0 : i32
    %c0_i32_0 = arith.constant 0 : i32
    return %arg0, %c0_i32 : i32, i32
  }
  func.func @transform_1(%arg0: i32) -> (i32, i32) {
    %c0_i32 = arith.constant 0 : i32
    %c0_i32_0 = arith.constant 0 : i32
    %c0_i32_1 = arith.constant 0 : i32
    return %c0_i32, %c0_i32_0 : i32, i32
  }
  func.func @transform_2(%arg0: i32) -> (i32, i32) {
    %c0_i32 = arith.constant 0 : i32
    %c0_i32_0 = arith.constant 0 : i32
    %c0_i32_1 = arith.constant 0 : i32
    return %c0_i32, %c0_i32_0 : i32, i32
  }
  func.func @transform_3(%arg0: i32) -> (i32, i32) {
    %c0_i32 = arith.constant 0 : i32
    %c0_i32_0 = arith.constant 0 : i32
    %c0_i32_1 = arith.constant 0 : i32
    return %c0_i32, %c0_i32_0 : i32, i32
  }
  func.func @transform_4(%arg0: i32) -> (i32, i32) {
    %c0_i32 = arith.constant 0 : i32
    %c0_i32_0 = arith.constant 0 : i32
    %c0_i32_1 = arith.constant 0 : i32
    return %c0_i32, %c0_i32_0 : i32, i32
  }
  func.func @transform_5(%arg0: i32) -> (i32, i32) {
    %c0_i32 = arith.constant 0 : i32
    %c0_i32_0 = arith.constant 0 : i32
    %c0_i32_1 = arith.constant 0 : i32
    return %c0_i32, %c0_i32_0 : i32, i32
  }
  func.func @transform_6(%arg0: i32) -> (i32, i32) {
    %c0_i32 = arith.constant 0 : i32
    %c0_i32_0 = arith.constant 0 : i32
    %c0_i32_1 = arith.constant 0 : i32
    return %c0_i32, %c0_i32_0 : i32, i32
  }
  func.func @transform_7(%arg0: i32) -> (i32, i32) {
    %c0_i32 = arith.constant 0 : i32
    %c0_i32_0 = arith.constant 0 : i32
    return %arg0, %c0_i32 : i32, i32
  }
}

</mosaic_0001>

<llo_original>
// kernel: tpu_custom_call.1
$region0: #{tpu_custom_call.1}
  #allocation0 [shape = 'u32[]', space=smem, size = 0x4, offset = 0x4, fixed_abs, tag = 'smem constant byte address 0x4 - core index']
  #allocation1 [shape = 'u32[144,128]{1,0:T(1,128)}', space=vmem, size = 0x12000, scoped, tag = 'internal scratch']
  %s0 = inlined_call_operand.vmem [shape: f32[8,16], index: 0, kind: input, shape index: {}]
  %s1 = inlined_call_operand.vmem [shape: bf16[16,512], index: 1, kind: input, shape index: {}]
  %s2 = inlined_call_operand.vmem [shape: f32[1,512], index: 2, kind: input, shape index: {}]
  %s3 = inlined_call_operand.hbm [shape: bf16[512,384], index: 3, kind: input, shape index: {}]
  %s4 = inlined_call_operand.vmem [shape: f32[1,384], index: 4, kind: input, shape index: {}]
  %s5 = inlined_call_operand.vmem [shape: f32[384,4], index: 5, kind: input, shape index: {}]
  %s6 = inlined_call_operand.vmem [shape: f32[1,4], index: 6, kind: input, shape index: {}]
  %s7 = inlined_call_operand.vmem [shape: f32[8,4], index: 7, kind: output, shape index: {}]
  %s8 = sld [smem:[#allocation0]]
  $region42: #{tpu_custom_call.1} parent=0
    _
  %s10 = ssub.s32 1, %s8
  %s11 = scalar_select 0, %s10, %s8
  $region1: #{tpu_custom_call.1} parent=0
    #allocation2 [shape = 'u8[393216]{0}', space=vmem, size = 0x60000, scoped, tag = 'input window, operand 3, single buffered']
    #allocation3 [shape = 's32[1]{0}', space=sflag, size = 0x4, scoped, tag = 'scoped memory for tpu_custom_call.1']
    %12 = vsyncpa [#allocation3], 0
    // Predicated region
    $region2: #{tpu_custom_call.1} parent=1 // pred_check
      _
    $region3: #{tpu_custom_call.1} parent=1 // pred_check_branch
      %14 = sbr.rel (0) target = $region5
    $region4: #{tpu_custom_call.1} parent=1 // pred_region
      _
    $region5: #{tpu_custom_call.1} parent=1 // pred_fallthru
      _
    // Predicated region
    $region6: #{tpu_custom_call.1} parent=1 // pred_check
      _
    $region7: #{tpu_custom_call.1} parent=1 // pred_check_branch
      %16 = sbr.rel (0) target = $region9
    $region8: #{tpu_custom_call.1} parent=1 // pred_region
      _
    $region9: #{tpu_custom_call.1} parent=1 // pred_fallthru
      _
    // Predicated region
    $region10: #{tpu_custom_call.1} parent=1 // pred_check
      _
    $region11: #{tpu_custom_call.1} parent=1 // pred_check_branch
      %18 = sbr.rel (0) target = $region13
    $region12: #{tpu_custom_call.1} parent=1 // pred_region
      _
    $region13: #{tpu_custom_call.1} parent=1 // pred_fallthru
      _
    // Predicated region
    $region14: #{tpu_custom_call.1} parent=1 // pred_check
      _
    $region15: #{tpu_custom_call.1} parent=1 // pred_check_branch
      %20 = sbr.rel (0) target = $region17
    $region16: #{tpu_custom_call.1} parent=1 // pred_region
      %s22 = ssub.s32 12288, 12288
      %23 = vsyncadd [#allocation3], %s22
      %s24 = sshll.u32 [#allocation2], 4
      %s25 = int_to_ptr.vmem [resolvable:$true] %s24
      %30 = dma.hbm_to_vmem [thread:$0]  %s3, 12288, %s25, [#allocation3], 192, 192, 12
    $region17: #{tpu_custom_call.1} parent=1 // pred_fallthru
      _
    // Predicated region
    $region18: #{tpu_custom_call.1} parent=1 // pred_check
      _
    $region19: #{tpu_custom_call.1} parent=1 // pred_check_branch
      %32 = sbr.rel (0) target = $region21
    $region20: #{tpu_custom_call.1} parent=1 // pred_region
      _
    $region21: #{tpu_custom_call.1} parent=1 // pred_fallthru
      _
    // Predicated region
    $region22: #{tpu_custom_call.1} parent=1 // pred_check
      _
    $region23: #{tpu_custom_call.1} parent=1 // pred_check_branch
      %34 = sbr.rel (0) target = $region25
    $region24: #{tpu_custom_call.1} parent=1 // pred_region
      _
    $region25: #{tpu_custom_call.1} parent=1 // pred_fallthru
      _
    // Predicated region
    $region26: #{tpu_custom_call.1} parent=1 // pred_check
      _
    $region27: #{tpu_custom_call.1} parent=1 // pred_check_branch
      %36 = sbr.rel (0) target = $region29
    $region28: #{tpu_custom_call.1} parent=1 // pred_region
      _
    $region29: #{tpu_custom_call.1} parent=1 // pred_fallthru
      _
    // Predicated region
    $region30: #{tpu_custom_call.1} parent=1 // pred_check
      _
    $region31: #{tpu_custom_call.1} parent=1 // pred_check_branch
      %38 = sbr.rel (0) target = $region33
    $region32: #{tpu_custom_call.1} parent=1 // pred_region
      %39 = dma.done [#allocation3], 12288
    $region33: #{tpu_custom_call.1} parent=1 // pred_fallthru
      _
    %v41 = vld [vmem:[%s0] sm:$0xff]
    %v42 = vpack.c.bf16 %v41, %v41
    %v43 = vld [vmem:[%s1] sm:$0xff]
    %v44 = vld [vmem:[%s1 + $0x8] sm:$0xff]
    %v45 = vld [vmem:[%s1 + $0x10] sm:$0xff]
    %v46 = vld [vmem:[%s1 + $0x18] sm:$0xff]
    %v47 = vld [vmem:[%s2] sm:$0xf]
    %v49 = vlaneseq
    %v50 = vshrl.u32 %v49, 7
    %v51 = vsub.s32 0, %v50
    %v52 = vrot.slane %v47, %v51
    %v53 = vlaneseq
    %v54 = vshrl.u32 %v53, 7
    %v55 = vsub.s32 1, %v54
    %v56 = vrot.slane %v47, %v55
    %v57 = vlaneseq
    %v58 = vshrl.u32 %v57, 7
    %v59 = vsub.s32 2, %v58
    %v60 = vrot.slane %v47, %v59
    %v61 = vlaneseq
    %v62 = vshrl.u32 %v61, 7
    %v63 = vsub.s32 3, %v62
    %v64 = vrot.slane %v47, %v63
    %v73 = vunpack.c.l.b16 %v43
    %v74 = vunpack.c.h.b16 %v43
    %v75 = vunpack.c.l.b16 %v44
    %v76 = vunpack.c.h.b16 %v44
    %v77 = vunpack.c.l.b16 %v45
    %v78 = vunpack.c.h.b16 %v45
    %v79 = vunpack.c.l.b16 %v46
    %v80 = vunpack.c.h.b16 %v46
    %v81 = vpack.c.b16 %v77, %v73
    %v82 = vpack.c.b16 %v78, %v74
    %v83 = vpack.c.b16 %v79, %v75
    %v84 = vpack.c.b16 %v80, %v76
    %vm89 = vcmask 130048
    %v91 = vsel %vm89, %v42, 0
    %93 = vmatprep.subr.bf16.mxu0 %v82
    %94 = vmatpush1.bf16.msra.mxu0 %v81
    %95 = vmatprep.subr.bf16.mxu0 0
    %96 = vmatpush1.bf16.msra.mxu0 0
    %97 = vmatprep.subr.bf16.mxu0 0
    %98 = vmatpush1.bf16.msra.mxu0 0
    %99 = vmatprep.subr.bf16.mxu0 0
    %100 = vmatpush1.bf16.msra.mxu0 0
    %101 = vmatprep.subr.bf16.mxu0 0
    %102 = vmatpush1.bf16.msra.mxu0 0
    %103 = vmatprep.subr.bf16.mxu0 0
    %104 = vmatpush1.bf16.msra.mxu0 0
    %105 = vmatprep.subr.bf16.mxu0 0
    %106 = vmatpush1.bf16.msra.mxu0 0
    %107 = vmatprep.subr.bf16.mxu0 0
    %108 = vmatpush1.bf16.msra.mxu0 0
    %109 = vmatprep.subr.bf16.mxu0 0
    %110 = vmatpush1.bf16.msra.mxu0 0
    %111 = vmatprep.subr.bf16.mxu0 0
    %112 = vmatpush1.bf16.msra.mxu0 0
    %113 = vmatprep.subr.bf16.mxu0 0
    %114 = vmatpush1.bf16.msra.mxu0 0
    %115 = vmatprep.subr.bf16.mxu0 0
    %116 = vmatpush1.bf16.msra.mxu0 0
    %117 = vmatprep.subr.bf16.mxu0 0
    %118 = vmatpush1.bf16.msra.mxu0 0
    %119 = vmatprep.subr.bf16.mxu0 0
    %120 = vmatpush1.bf16.msra.mxu0 0
    %121 = vmatprep.subr.bf16.mxu0 0
    %122 = vmatpush1.bf16.msra.mxu0 0
    %123 = vmatprep.subr.bf16.mxu0 0
    %124 = vmatpush1.bf16.msra.mxu0 0
    %125 = vmatprep.mubr.bf16.mxu0 0
    %126 = vmatmul.mubr.bf16.gmra.mrb[0].mxu0 %v91
    %v127 = vpop.f32.mrb[0].mxu0
    %v128 = vadd.f32 %v52, %v127
    %v129 = vpop.f32.mrb[0].mxu0
    %v130 = vadd.f32 %v56, %v129
    %v131 = vpop.f32.mrb[0].mxu0
    %v132 = vpop.f32.mrb[0].mxu0
    %133 = vdwg.mxu0
    %134 = vmatprep.subr.bf16.mxu0 %v84
    %135 = vmatpush1.bf16.msra.mxu0 %v83
    %136 = vmatprep.subr.bf16.mxu0 0
    %137 = vmatpush1.bf16.msra.mxu0 0
    %138 = vmatprep.subr.bf16.mxu0 0
    %139 = vmatpush1.bf16.msra.mxu0 0
    %140 = vmatprep.subr.bf16.mxu0 0
    %141 = vmatpush1.bf16.msra.mxu0 0
    %142 = vmatprep.subr.bf16.mxu0 0
    %143 = vmatpush1.bf16.msra.mxu0 0
    %144 = vmatprep.subr.bf16.mxu0 0
    %145 = vmatpush1.bf16.msra.mxu0 0
    %146 = vmatprep.subr.bf16.mxu0 0
    %147 = vmatpush1.bf16.msra.mxu0 0
    %148 = vmatprep.subr.bf16.mxu0 0
    %149 = vmatpush1.bf16.msra.mxu0 0
    %150 = vmatprep.subr.bf16.mxu0 0
    %151 = vmatpush1.bf16.msra.mxu0 0
    %152 = vmatprep.subr.bf16.mxu0 0
    %153 = vmatpush1.bf16.msra.mxu0 0
    %154 = vmatprep.subr.bf16.mxu0 0
    %155 = vmatpush1.bf16.msra.mxu0 0
    %156 = vmatprep.subr.bf16.mxu0 0
    %157 = vmatpush1.bf16.msra.mxu0 0
    %158 = vmatprep.subr.bf16.mxu0 0
    %159 = vmatpush1.bf16.msra.mxu0 0
    %160 = vmatprep.subr.bf16.mxu0 0
    %161 = vmatpush1.bf16.msra.mxu0 0
    %162 = vmatprep.subr.bf16.mxu0 0
    %163 = vmatpush1.bf16.msra.mxu0 0
    %164 = vmatprep.subr.bf16.mxu0 0
    %165 = vmatpush1.bf16.msra.mxu0 0
    %166 = vmatprep.mubr.bf16.mxu0 0
    %167 = vmatmul.mubr.bf16.gmra.mrb[0].mxu0 %v91
    %v168 = vpop.f32.mrb[0].mxu0
    %v169 = vadd.f32 %v60, %v168
    %v170 = vpop.f32.mrb[0].mxu0
    %v171 = vadd.f32 %v64, %v170
    %v172 = vpop.f32.mrb[0].mxu0
    %v173 = vpop.f32.mrb[0].mxu0
    %174 = vdwg.mxu0
    %v175 = vmax.f32 %v128, 0.0
    %v176 = vmax.f32 %v130, 0.0
    %v177 = vmax.f32 %v169, 0.0
    %v178 = vmax.f32 %v171, 0.0
    %v179 = vpack.c.bf16 %v175, %v175
    %v180 = vpack.c.bf16 %v176, %v176
    %v181 = vpack.c.bf16 %v177, %v177
    %v182 = vpack.c.bf16 %v178, %v178
    %v183 = vld [vmem:[#allocation2] sm:$0xff]
    %v184 = vld [vmem:[#allocation2 + $0x8] sm:$0xf]
    %v185 = vld [vmem:[#allocation2 + $0xc] sm:$0xff]
    %v186 = vld [vmem:[#allocation2 + $0x14] sm:$0xf]
    %v187 = vld [vmem:[#allocation2 + $0x18] sm:$0xff]
    %v188 = vld [vmem:[#allocation2 + $0x20] sm:$0xf]
    %v189 = vld [vmem:[#allocation2 + $0x24] sm:$0xff]
    %v190 = vld [vmem:[#allocation2 + $0x2c] sm:$0xf]
    %v191 = vld [vmem:[#allocation2 + $0x30] sm:$0xff]
    %v192 = vld [vmem:[#allocation2 + $0x38] sm:$0xf]
    %v193 = vld [vmem:[#allocation2 + $0x3c] sm:$0xff]
    %v194 = vld [vmem:[#allocation2 + $0x44] sm:$0xf]
    %v195 = vld [vmem:[#allocation2 + $0x48] sm:$0xff]
    %v196 = vld [vmem:[#allocation2 + $0x50] sm:$0xf]
    %v197 = vld [vmem:[#allocation2 + $0x54] sm:$0xff]
    %v198 = vld [vmem:[#allocation2 + $0x5c] sm:$0xf]
    %v199 = vld [vmem:[#allocation2 + $0x60] sm:$0xff]
    %v200 = vld [vmem:[#allocation2 + $0x68] sm:$0xf]
    %v201 = vld [vmem:[#allocation2 + $0x6c] sm:$0xff]
    %v202 = vld [vmem:[#allocation2 + $0x74] sm:$0xf]
    %v203 = vld [vmem:[#allocation2 + $0x78] sm:$0xff]
    %v204 = vld [vmem:[#allocation2 + $0x80] sm:$0xf]
    %v205 = vld [vmem:[#allocation2 + $0x84] sm:$0xff]
    %v206 = vld [vmem:[#allocation2 + $0x8c] sm:$0xf]
    %v207 = vld [vmem:[#allocation2 + $0x90] sm:$0xff]
    %v208 = vld [vmem:[#allocation2 + $0x98] sm:$0xf]
    %v209 = vld [vmem:[#allocation2 + $0x9c] sm:$0xff]
    %v210 = vld [vmem:[#allocation2 + $0xa4] sm:$0xf]
    %v211 = vld [vmem:[#allocation2 + $0xa8] sm:$0xff]
    %v212 = vld [vmem:[#allocation2 + $0xb0] sm:$0xf]
    %v213 = vld [vmem:[#allocation2 + $0xb4] sm:$0xff]
    %v214 = vld [vmem:[#allocation2 + $0xbc] sm:$0xf]
    %v215 = vld [vmem:[#allocation2 + $0xc0] sm:$0xff]
    %v216 = vld [vmem:[#allocation2 + $0xc8] sm:$0xf]
    %v217 = vld [vmem:[#allocation2 + $0xcc] sm:$0xff]
    %v218 = vld [vmem:[#allocation2 + $0xd4] sm:$0xf]
    %v219 = vld [vmem:[#allocation2 + $0xd8] sm:$0xff]
    %v220 = vld [vmem:[#allocation2 + $0xe0] sm:$0xf]
    %v221 = vld [vmem:[#allocation2 + $0xe4] sm:$0xff]
    %v222 = vld [vmem:[#allocation2 + $0xec] sm:$0xf]
    %v223 = vld [vmem:[#allocation2 + $0xf0] sm:$0xff]
    %v224 = vld [vmem:[#allocation2 + $0xf8] sm:$0xf]
    %v225 = vld [vmem:[#allocation2 + $0xfc] sm:$0xff]
    %v226 = vld [vmem:[#allocation2 + $0x104] sm:$0xf]
    %v227 = vld [vmem:[#allocation2 + $0x108] sm:$0xff]
    %v228 = vld [vmem:[#allocation2 + $0x110] sm:$0xf]
    %v229 = vld [vmem:[#allocation2 + $0x114] sm:$0xff]
    %v230 = vld [vmem:[#allocation2 + $0x11c] sm:$0xf]
    %v231 = vld [vmem:[#allocation2 + $0x120] sm:$0xff]
    %v232 = vld [vmem:[#allocation2 + $0x128] sm:$0xf]
    %v233 = vld [vmem:[#allocation2 + $0x12c] sm:$0xff]
    %v234 = vld [vmem:[#allocation2 + $0x134] sm:$0xf]
    %v235 = vld [vmem:[#allocation2 + $0x138] sm:$0xff]
    %v236 = vld [vmem:[#allocation2 + $0x140] sm:$0xf]
    %v237 = vld [vmem:[#allocation2 + $0x144] sm:$0xff]
    %v238 = vld [vmem:[#allocation2 + $0x14c] sm:$0xf]
    %v239 = vld [vmem:[#allocation2 + $0x150] sm:$0xff]
    %v240 = vld [vmem:[#allocation2 + $0x158] sm:$0xf]
    %v241 = vld [vmem:[#allocation2 + $0x15c] sm:$0xff]
    %v242 = vld [vmem:[#allocation2 + $0x164] sm:$0xf]
    %v243 = vld [vmem:[#allocation2 + $0x168] sm:$0xff]
    %v244 = vld [vmem:[#allocation2 + $0x170] sm:$0xf]
    %v245 = vld [vmem:[#allocation2 + $0x174] sm:$0xff]
    %v246 = vld [vmem:[#allocation2 + $0x17c] sm:$0xf]
    %v247 = vld [vmem:[#allocation2 + $0x180] sm:$0xff]
    %v248 = vld [vmem:[#allocation2 + $0x188] sm:$0xf]
    %v249 = vld [vmem:[#allocation2 + $0x18c] sm:$0xff]
    %v250 = vld [vmem:[#allocation2 + $0x194] sm:$0xf]
    %v251 = vld [vmem:[#allocation2 + $0x198] sm:$0xff]
    %v252 = vld [vmem:[#allocation2 + $0x1a0] sm:$0xf]
    %v253 = vld [vmem:[#allocation2 + $0x1a4] sm:$0xff]
    %v254 = vld [vmem:[#allocation2 + $0x1ac] sm:$0xf]
    %v255 = vld [vmem:[#allocation2 + $0x1b0] sm:$0xff]
    %v256 = vld [vmem:[#allocation2 + $0x1b8] sm:$0xf]
    %v257 = vld [vmem:[#allocation2 + $0x1bc] sm:$0xff]
    %v258 = vld [vmem:[#allocation2 + $0x1c4] sm:$0xf]
    %v259 = vld [vmem:[#allocation2 + $0x1c8] sm:$0xff]
    %v260 = vld [vmem:[#allocation2 + $0x1d0] sm:$0xf]
    %v261 = vld [vmem:[#allocation2 + $0x1d4] sm:$0xff]
    %v262 = vld [vmem:[#allocation2 + $0x1dc] sm:$0xf]
    %v263 = vld [vmem:[#allocation2 + $0x1e0] sm:$0xff]
    %v264 = vld [vmem:[#allocation2 + $0x1e8] sm:$0xf]
    %v265 = vld [vmem:[#allocation2 + $0x1ec] sm:$0xff]
    %v266 = vld [vmem:[#allocation2 + $0x1f4] sm:$0xf]
    %v267 = vld [vmem:[#allocation2 + $0x1f8] sm:$0xff]
    %v268 = vld [vmem:[#allocation2 + $0x200] sm:$0xf]
    %v269 = vld [vmem:[#allocation2 + $0x204] sm:$0xff]
    %v270 = vld [vmem:[#allocation2 + $0x20c] sm:$0xf]
    %v271 = vld [vmem:[#allocation2 + $0x210] sm:$0xff]
    %v272 = vld [vmem:[#allocation2 + $0x218] sm:$0xf]
    %v273 = vld [vmem:[#allocation2 + $0x21c] sm:$0xff]
    %v274 = vld [vmem:[#allocation2 + $0x224] sm:$0xf]
    %v275 = vld [vmem:[#allocation2 + $0x228] sm:$0xff]
    %v276 = vld [vmem:[#allocation2 + $0x230] sm:$0xf]
    %v277 = vld [vmem:[#allocation2 + $0x234] sm:$0xff]
    %v278 = vld [vmem:[#allocation2 + $0x23c] sm:$0xf]
    %v279 = vld [vmem:[#allocation2 + $0x240] sm:$0xff]
    %v280 = vld [vmem:[#allocation2 + $0x248] sm:$0xf]
    %v281 = vld [vmem:[#allocation2 + $0x24c] sm:$0xff]
    %v282 = vld [vmem:[#allocation2 + $0x254] sm:$0xf]
    %v283 = vld [vmem:[#allocation2 + $0x258] sm:$0xff]
    %v284 = vld [vmem:[#allocation2 + $0x260] sm:$0xf]
    %v285 = vld [vmem:[#allocation2 + $0x264] sm:$0xff]
    %v286 = vld [vmem:[#allocation2 + $0x26c] sm:$0xf]
    %v287 = vld [vmem:[#allocation2 + $0x270] sm:$0xff]
    %v288 = vld [vmem:[#allocation2 + $0x278] sm:$0xf]
    %v289 = vld [vmem:[#allocation2 + $0x27c] sm:$0xff]
    %v290 = vld [vmem:[#allocation2 + $0x284] sm:$0xf]
    %v291 = vld [vmem:[#allocation2 + $0x288] sm:$0xff]
    %v292 = vld [vmem:[#allocation2 + $0x290] sm:$0xf]
    %v293 = vld [vmem:[#allocation2 + $0x294] sm:$0xff]
    %v294 = vld [vmem:[#allocation2 + $0x29c] sm:$0xf]
    %v295 = vld [vmem:[#allocation2 + $0x2a0] sm:$0xff]
    %v296 = vld [vmem:[#allocation2 + $0x2a8] sm:$0xf]
    %v297 = vld [vmem:[#allocation2 + $0x2ac] sm:$0xff]
    %v298 = vld [vmem:[#allocation2 + $0x2b4] sm:$0xf]
    %v299 = vld [vmem:[#allocation2 + $0x2b8] sm:$0xff]
    %v300 = vld [vmem:[#allocation2 + $0x2c0] sm:$0xf]
    %v301 = vld [vmem:[#allocation2 + $0x2c4] sm:$0xff]
    %v302 = vld [vmem:[#allocation2 + $0x2cc] sm:$0xf]
    %v303 = vld [vmem:[#allocation2 + $0x2d0] sm:$0xff]
    %v304 = vld [vmem:[#allocation2 + $0x2d8] sm:$0xf]
    %v305 = vld [vmem:[#allocation2 + $0x2dc] sm:$0xff]
    %v306 = vld [vmem:[#allocation2 + $0x2e4] sm:$0xf]
    %v307 = vld [vmem:[#allocation2 + $0x2e8] sm:$0xff]
    %v308 = vld [vmem:[#allocation2 + $0x2f0] sm:$0xf]
    %v309 = vld [vmem:[#allocation2 + $0x2f4] sm:$0xff]
    %v310 = vld [vmem:[#allocation2 + $0x2fc] sm:$0xf]
    %v311 = vld [vmem:[%s4] sm:$0x7]
    %v313 = vlaneseq
    %v314 = vshrl.u32 %v313, 7
    %v315 = vsub.s32 0, %v314
    %v316 = vrot.slane %v311, %v315
    %v317 = vlaneseq
    %v318 = vshrl.u32 %v317, 7
    %v319 = vsub.s32 1, %v318
    %v320 = vrot.slane %v311, %v319
    %v321 = vlaneseq
    %v322 = vshrl.u32 %v321, 7
    %v323 = vsub.s32 2, %v322
    %v324 = vrot.slane %v311, %v323
    %v456 = vunpack.c.l.b16 %v183
    %v457 = vunpack.c.h.b16 %v183
    %v458 = vunpack.c.l.b16 %v184
    %v459 = vunpack.c.l.b16 %v185
    %v460 = vunpack.c.h.b16 %v185
    %v461 = vunpack.c.l.b16 %v186
    %v462 = vunpack.c.l.b16 %v187
    %v463 = vunpack.c.h.b16 %v187
    %v464 = vunpack.c.l.b16 %v188
    %v465 = vunpack.c.l.b16 %v189
    %v466 = vunpack.c.h.b16 %v189
    %v467 = vunpack.c.l.b16 %v190
    %v468 = vunpack.c.l.b16 %v191
    %v469 = vunpack.c.h.b16 %v191
    %v470 = vunpack.c.l.b16 %v192
    %v471 = vunpack.c.l.b16 %v193
    %v472 = vunpack.c.h.b16 %v193
    %v473 = vunpack.c.l.b16 %v194
    %v474 = vunpack.c.l.b16 %v195
    %v475 = vunpack.c.h.b16 %v195
    %v476 = vunpack.c.l.b16 %v196
    %v477 = vunpack.c.l.b16 %v197
    %v478 = vunpack.c.h.b16 %v197
    %v479 = vunpack.c.l.b16 %v198
    %v480 = vunpack.c.l.b16 %v199
    %v481 = vunpack.c.h.b16 %v199
    %v482 = vunpack.c.l.b16 %v200
    %v483 = vunpack.c.l.b16 %v201
    %v484 = vunpack.c.h.b16 %v201
    %v485 = vunpack.c.l.b16 %v202
    %v486 = vunpack.c.l.b16 %v203
    %v487 = vunpack.c.h.b16 %v203
    %v488 = vunpack.c.l.b16 %v204
    %v489 = vunpack.c.l.b16 %v205
    %v490 = vunpack.c.h.b16 %v205
    %v491 = vunpack.c.l.b16 %v206
    %v492 = vunpack.c.l.b16 %v207
    %v493 = vunpack.c.h.b16 %v207
    %v494 = vunpack.c.l.b16 %v208
    %v495 = vunpack.c.l.b16 %v209
    %v496 = vunpack.c.h.b16 %v209
    %v497 = vunpack.c.l.b16 %v210
    %v498 = vunpack.c.l.b16 %v211
    %v499 = vunpack.c.h.b16 %v211
    %v500 = vunpack.c.l.b16 %v212
    %v501 = vunpack.c.l.b16 %v213
    %v502 = vunpack.c.h.b16 %v213
    %v503 = vunpack.c.l.b16 %v214
    %v504 = vunpack.c.l.b16 %v215
    %v505 = vunpack.c.h.b16 %v215
    %v506 = vunpack.c.l.b16 %v216
    %v507 = vunpack.c.l.b16 %v217
    %v508 = vunpack.c.h.b16 %v217
    %v509 = vunpack.c.l.b16 %v218
    %v510 = vunpack.c.l.b16 %v219
    %v511 = vunpack.c.h.b16 %v219
    %v512 = vunpack.c.l.b16 %v220
    %v513 = vunpack.c.l.b16 %v221
    %v514 = vunpack.c.h.b16 %v221
    %v515 = vunpack.c.l.b16 %v222
    %v516 = vunpack.c.l.b16 %v223
    %v517 = vunpack.c.h.b16 %v223
    %v518 = vunpack.c.l.b16 %v224
    %v519 = vunpack.c.l.b16 %v225
    %v520 = vunpack.c.h.b16 %v225
    %v521 = vunpack.c.l.b16 %v226
    %v522 = vunpack.c.l.b16 %v227
    %v523 = vunpack.c.h.b16 %v227
    %v524 = vunpack.c.l.b16 %v228
    %v525 = vunpack.c.l.b16 %v229
    %v526 = vunpack.c.h.b16 %v229
    %v527 = vunpack.c.l.b16 %v230
    %v528 = vunpack.c.l.b16 %v231
    %v529 = vunpack.c.h.b16 %v231
    %v530 = vunpack.c.l.b16 %v232
    %v531 = vunpack.c.l.b16 %v233
    %v532 = vunpack.c.h.b16 %v233
    %v533 = vunpack.c.l.b16 %v234
    %v534 = vunpack.c.l.b16 %v235
    %v535 = vunpack.c.h.b16 %v235
    %v536 = vunpack.c.l.b16 %v236
    %v537 = vunpack.c.l.b16 %v237
    %v538 = vunpack.c.h.b16 %v237
    %v539 = vunpack.c.l.b16 %v238
    %v540 = vunpack.c.l.b16 %v239
    %v541 = vunpack.c.h.b16 %v239
    %v542 = vunpack.c.l.b16 %v240
    %v543 = vunpack.c.l.b16 %v241
    %v544 = vunpack.c.h.b16 %v241
    %v545 = vunpack.c.l.b16 %v242
    %v546 = vunpack.c.l.b16 %v243
    %v547 = vunpack.c.h.b16 %v243
    %v548 = vunpack.c.l.b16 %v244
    %v549 = vunpack.c.l.b16 %v245
    %v550 = vunpack.c.h.b16 %v245
    %v551 = vunpack.c.l.b16 %v246
    %v552 = vunpack.c.l.b16 %v247
    %v553 = vunpack.c.h.b16 %v247
    %v554 = vunpack.c.l.b16 %v248
    %v555 = vunpack.c.l.b16 %v249
    %v556 = vunpack.c.h.b16 %v249
    %v557 = vunpack.c.l.b16 %v250
    %v558 = vunpack.c.l.b16 %v251
    %v559 = vunpack.c.h.b16 %v251
    %v560 = vunpack.c.l.b16 %v252
    %v561 = vunpack.c.l.b16 %v253
    %v562 = vunpack.c.h.b16 %v253
    %v563 = vunpack.c.l.b16 %v254
    %v564 = vunpack.c.l.b16 %v255
    %v565 = vunpack.c.h.b16 %v255
    %v566 = vunpack.c.l.b16 %v256
    %v567 = vunpack.c.l.b16 %v257
    %v568 = vunpack.c.h.b16 %v257
    %v569 = vunpack.c.l.b16 %v258
    %v570 = vunpack.c.l.b16 %v259
    %v571 = vunpack.c.h.b16 %v259
    %v572 = vunpack.c.l.b16 %v260
    %v573 = vunpack.c.l.b16 %v261
    %v574 = vunpack.c.h.b16 %v261
    %v575 = vunpack.c.l.b16 %v262
    %v576 = vunpack.c.l.b16 %v263
    %v577 = vunpack.c.h.b16 %v263
    %v578 = vunpack.c.l.b16 %v264
    %v579 = vunpack.c.l.b16 %v265
    %v580 = vunpack.c.h.b16 %v265
    %v581 = vunpack.c.l.b16 %v266
    %v582 = vunpack.c.l.b16 %v267
    %v583 = vunpack.c.h.b16 %v267
    %v584 = vunpack.c.l.b16 %v268
    %v585 = vunpack.c.l.b16 %v269
    %v586 = vunpack.c.h.b16 %v269
    %v587 = vunpack.c.l.b16 %v270
    %v588 = vunpack.c.l.b16 %v271
    %v589 = vunpack.c.h.b16 %v271
    %v590 = vunpack.c.l.b16 %v272
    %v591 = vunpack.c.l.b16 %v273
    %v592 = vunpack.c.h.b16 %v273
    %v593 = vunpack.c.l.b16 %v274
    %v594 = vunpack.c.l.b16 %v275
    %v595 = vunpack.c.h.b16 %v275
    %v596 = vunpack.c.l.b16 %v276
    %v597 = vunpack.c.l.b16 %v277
    %v598 = vunpack.c.h.b16 %v277
    %v599 = vunpack.c.l.b16 %v278
    %v600 = vunpack.c.l.b16 %v279
    %v601 = vunpack.c.h.b16 %v279
    %v602 = vunpack.c.l.b16 %v280
    %v603 = vunpack.c.l.b16 %v281
    %v604 = vunpack.c.h.b16 %v281
    %v605 = vunpack.c.l.b16 %v282
    %v606 = vunpack.c.l.b16 %v283
    %v607 = vunpack.c.h.b16 %v283
    %v608 = vunpack.c.l.b16 %v284
    %v609 = vunpack.c.l.b16 %v285
    %v610 = vunpack.c.h.b16 %v285
    %v611 = vunpack.c.l.b16 %v286
    %v612 = vunpack.c.l.b16 %v287
    %v613 = vunpack.c.h.b16 %v287
    %v614 = vunpack.c.l.b16 %v288
    %v615 = vunpack.c.l.b16 %v289
    %v616 = vunpack.c.h.b16 %v289
    %v617 = vunpack.c.l.b16 %v290
    %v618 = vunpack.c.l.b16 %v291
    %v619 = vunpack.c.h.b16 %v291
    %v620 = vunpack.c.l.b16 %v292
    %v621 = vunpack.c.l.b16 %v293
    %v622 = vunpack.c.h.b16 %v293
    %v623 = vunpack.c.l.b16 %v294
    %v624 = vunpack.c.l.b16 %v295
    %v625 = vunpack.c.h.b16 %v295
    %v626 = vunpack.c.l.b16 %v296
    %v627 = vunpack.c.l.b16 %v297
    %v628 = vunpack.c.h.b16 %v297
    %v629 = vunpack.c.l.b16 %v298
    %v630 = vunpack.c.l.b16 %v299
    %v631 = vunpack.c.h.b16 %v299
    %v632 = vunpack.c.l.b16 %v300
    %v633 = vunpack.c.l.b16 %v301
    %v634 = vunpack.c.h.b16 %v301
    %v635 = vunpack.c.l.b16 %v302
    %v636 = vunpack.c.l.b16 %v303
    %v637 = vunpack.c.h.b16 %v303
    %v638 = vunpack.c.l.b16 %v304
    %v639 = vunpack.c.l.b16 %v305
    %v640 = vunpack.c.h.b16 %v305
    %v641 = vunpack.c.l.b16 %v306
    %v642 = vunpack.c.l.b16 %v307
    %v643 = vunpack.c.h.b16 %v307
    %v644 = vunpack.c.l.b16 %v308
    %v645 = vunpack.c.l.b16 %v309
    %v646 = vunpack.c.h.b16 %v309
    %v647 = vunpack.c.l.b16 %v310
    %v648 = vpack.c.b16 %v459, %v456
    %v649 = vpack.c.b16 %v460, %v457
    %v650 = vpack.c.b16 %v461, %v458
    %v651 = vpack.c.b16 %v465, %v462
    %v652 = vpack.c.b16 %v466, %v463
    %v653 = vpack.c.b16 %v467, %v464
    %v654 = vpack.c.b16 %v471, %v468
    %v655 = vpack.c.b16 %v472, %v469
    %v656 = vpack.c.b16 %v473, %v470
    %v657 = vpack.c.b16 %v477, %v474
    %v658 = vpack.c.b16 %v478, %v475
    %v659 = vpack.c.b16 %v479, %v476
    %v660 = vpack.c.b16 %v483, %v480
    %v661 = vpack.c.b16 %v484, %v481
    %v662 = vpack.c.b16 %v485, %v482
    %v663 = vpack.c.b16 %v489, %v486
    %v664 = vpack.c.b16 %v490, %v487
    %v665 = vpack.c.b16 %v491, %v488
    %v666 = vpack.c.b16 %v495, %v492
    %v667 = vpack.c.b16 %v496, %v493
    %v668 = vpack.c.b16 %v497, %v494
    %v669 = vpack.c.b16 %v501, %v498
    %v670 = vpack.c.b16 %v502, %v499
    %v671 = vpack.c.b16 %v503, %v500
    %v672 = vpack.c.b16 %v507, %v504
    %v673 = vpack.c.b16 %v508, %v505
    %v674 = vpack.c.b16 %v509, %v506
    %v675 = vpack.c.b16 %v513, %v510
    %v676 = vpack.c.b16 %v514, %v511
    %v677 = vpack.c.b16 %v515, %v512
    %v678 = vpack.c.b16 %v519, %v516
    %v679 = vpack.c.b16 %v520, %v517
    %v680 = vpack.c.b16 %v521, %v518
    %v681 = vpack.c.b16 %v525, %v522
    %v682 = vpack.c.b16 %v526, %v523
    %v683 = vpack.c.b16 %v527, %v524
    %v684 = vpack.c.b16 %v531, %v528
    %v685 = vpack.c.b16 %v532, %v529
    %v686 = vpack.c.b16 %v533, %v530
    %v687 = vpack.c.b16 %v537, %v534
    %v688 = vpack.c.b16 %v538, %v535
    %v689 = vpack.c.b16 %v539, %v536
    %v690 = vpack.c.b16 %v543, %v540
    %v691 = vpack.c.b16 %v544, %v541
    %v692 = vpack.c.b16 %v545, %v542
    %v693 = vpack.c.b16 %v549, %v546
    %v694 = vpack.c.b16 %v550, %v547
    %v695 = vpack.c.b16 %v551, %v548
    %v696 = vpack.c.b16 %v555, %v552
    %v697 = vpack.c.b16 %v556, %v553
    %v698 = vpack.c.b16 %v557, %v554
    %v699 = vpack.c.b16 %v561, %v558
    %v700 = vpack.c.b16 %v562, %v559
    %v701 = vpack.c.b16 %v563, %v560
    %v702 = vpack.c.b16 %v567, %v564
    %v703 = vpack.c.b16 %v568, %v565
    %v704 = vpack.c.b16 %v569, %v566
    %v705 = vpack.c.b16 %v573, %v570
    %v706 = vpack.c.b16 %v574, %v571
    %v707 = vpack.c.b16 %v575, %v572
    %v708 = vpack.c.b16 %v579, %v576
    %v709 = vpack.c.b16 %v580, %v577
    %v710 = vpack.c.b16 %v581, %v578
    %v711 = vpack.c.b16 %v585, %v582
    %v712 = vpack.c.b16 %v586, %v583
    %v713 = vpack.c.b16 %v587, %v584
    %v714 = vpack.c.b16 %v591, %v588
    %v715 = vpack.c.b16 %v592, %v589
    %v716 = vpack.c.b16 %v593, %v590
    %v717 = vpack.c.b16 %v597, %v594
    %v718 = vpack.c.b16 %v598, %v595
    %v719 = vpack.c.b16 %v599, %v596
    %v720 = vpack.c.b16 %v603, %v600
    %v721 = vpack.c.b16 %v604, %v601
    %v722 = vpack.c.b16 %v605, %v602
    %v723 = vpack.c.b16 %v609, %v606
    %v724 = vpack.c.b16 %v610, %v607
    %v725 = vpack.c.b16 %v611, %v608
    %v726 = vpack.c.b16 %v615, %v612
    %v727 = vpack.c.b16 %v616, %v613
    %v728 = vpack.c.b16 %v617, %v614
    %v729 = vpack.c.b16 %v621, %v618
    %v730 = vpack.c.b16 %v622, %v619
    %v731 = vpack.c.b16 %v623, %v620
    %v732 = vpack.c.b16 %v627, %v624
    %v733 = vpack.c.b16 %v628, %v625
    %v734 = vpack.c.b16 %v629, %v626
    %v735 = vpack.c.b16 %v633, %v630
    %v736 = vpack.c.b16 %v634, %v631
    %v737 = vpack.c.b16 %v635, %v632
    %v738 = vpack.c.b16 %v639, %v636
    %v739 = vpack.c.b16 %v640, %v637
    %v740 = vpack.c.b16 %v641, %v638
    %v741 = vpack.c.b16 %v645, %v642
    %v742 = vpack.c.b16 %v646, %v643
    %v743 = vpack.c.b16 %v647, %v644
    %840 = vmatprep.subr.bf16.mxu0 %v649
    %841 = vmatpush1.bf16.msra.mxu0 %v648
    %842 = vmatprep.subr.bf16.mxu0 %v652
    %843 = vmatpush1.bf16.msra.mxu0 %v651
    %844 = vmatprep.subr.bf16.mxu0 %v655
    %845 = vmatpush1.bf16.msra.mxu0 %v654
    %846 = vmatprep.subr.bf16.mxu0 %v658
    %847 = vmatpush1.bf16.msra.mxu0 %v657
    %848 = vmatprep.subr.bf16.mxu0 %v661
    %849 = vmatpush1.bf16.msra.mxu0 %v660
    %850 = vmatprep.subr.bf16.mxu0 %v664
    %851 = vmatpush1.bf16.msra.mxu0 %v663
    %852 = vmatprep.subr.bf16.mxu0 %v667
    %853 = vmatpush1.bf16.msra.mxu0 %v666
    %854 = vmatprep.subr.bf16.mxu0 %v670
    %855 = vmatpush1.bf16.msra.mxu0 %v669
    %856 = vmatprep.subr.bf16.mxu0 %v673
    %857 = vmatpush1.bf16.msra.mxu0 %v672
    %858 = vmatprep.subr.bf16.mxu0 %v676
    %859 = vmatpush1.bf16.msra.mxu0 %v675
    %860 = vmatprep.subr.bf16.mxu0 %v679
    %861 = vmatpush1.bf16.msra.mxu0 %v678
    %862 = vmatprep.subr.bf16.mxu0 %v682
    %863 = vmatpush1.bf16.msra.mxu0 %v681
    %864 = vmatprep.subr.bf16.mxu0 %v685
    %865 = vmatpush1.bf16.msra.mxu0 %v684
    %866 = vmatprep.subr.bf16.mxu0 %v688
    %867 = vmatpush1.bf16.msra.mxu0 %v687
    %868 = vmatprep.subr.bf16.mxu0 %v691
    %869 = vmatpush1.bf16.msra.mxu0 %v690
    %870 = vmatprep.subr.bf16.mxu0 %v694
    %871 = vmatpush1.bf16.msra.mxu0 %v693
    %872 = vmatprep.mubr.bf16.mxu0 %v180
    %873 = vmatmul.mubr.bf16.gmra.mrb[0].mxu0 %v179
    %v874 = vpop.f32.mrb[0].mxu0
    %v875 = vadd.f32 %v316, %v874
    %v876 = vpop.f32.mrb[0].mxu0
    %v877 = vadd.f32 %v320, %v876
    %v878 = vpop.f32.mrb[0].mxu0
    %v879 = vpop.f32.mrb[0].mxu0
    %880 = vdwg.mxu0
    %881 = vmatprep.subr.bf16.mxu0 %v697
    %882 = vmatpush1.bf16.msra.mxu0 %v696
    %883 = vmatprep.subr.bf16.mxu0 %v700
    %884 = vmatpush1.bf16.msra.mxu0 %v699
    %885 = vmatprep.subr.bf16.mxu0 %v703
    %886 = vmatpush1.bf16.msra.mxu0 %v702
    %887 = vmatprep.subr.bf16.mxu0 %v706
    %888 = vmatpush1.bf16.msra.mxu0 %v705
    %889 = vmatprep.subr.bf16.mxu0 %v709
    %890 = vmatpush1.bf16.msra.mxu0 %v708
    %891 = vmatprep.subr.bf16.mxu0 %v712
    %892 = vmatpush1.bf16.msra.mxu0 %v711
    %893 = vmatprep.subr.bf16.mxu0 %v715
    %894 = vmatpush1.bf16.msra.mxu0 %v714
    %895 = vmatprep.subr.bf16.mxu0 %v718
    %896 = vmatpush1.bf16.msra.mxu0 %v717
    %897 = vmatprep.subr.bf16.mxu0 %v721
    %898 = vmatpush1.bf16.msra.mxu0 %v720
    %899 = vmatprep.subr.bf16.mxu0 %v724
    %900 = vmatpush1.bf16.msra.mxu0 %v723
    %901 = vmatprep.subr.bf16.mxu0 %v727
    %902 = vmatpush1.bf16.msra.mxu0 %v726
    %903 = vmatprep.subr.bf16.mxu0 %v730
    %904 = vmatpush1.bf16.msra.mxu0 %v729
    %905 = vmatprep.subr.bf16.mxu0 %v733
    %906 = vmatpush1.bf16.msra.mxu0 %v732
    %907 = vmatprep.subr.bf16.mxu0 %v736
    %908 = vmatpush1.bf16.msra.mxu0 %v735
    %909 = vmatprep.subr.bf16.mxu0 %v739
    %910 = vmatpush1.bf16.msra.mxu0 %v738
    %911 = vmatprep.subr.bf16.mxu0 %v742
    %912 = vmatpush1.bf16.msra.mxu0 %v741
    %913 = vmatprep.mubr.bf16.mxu0 %v182
    %914 = vmatmul.mubr.bf16.gmra.mrb[0].mxu0 %v181
    %v915 = vpop.f32.mrb[0].mxu0
    %v916 = vadd.f32 %v875, %v915
    %v917 = vpop.f32.mrb[0].mxu0
    %v918 = vadd.f32 %v877, %v917
    %v919 = vpop.f32.mrb[0].mxu0
    %v920 = vpop.f32.mrb[0].mxu0
    %921 = vdwg.mxu0
    %922 = vmatprep.subr.bf16.mxu0 0
    %923 = vmatpush1.bf16.msra.mxu0 %v650
    %924 = vmatprep.subr.bf16.mxu0 0
    %925 = vmatpush1.bf16.msra.mxu0 %v653
    %926 = vmatprep.subr.bf16.mxu0 0
    %927 = vmatpush1.bf16.msra.mxu0 %v656
    %928 = vmatprep.subr.bf16.mxu0 0
    %929 = vmatpush1.bf16.msra.mxu0 %v659
    %930 = vmatprep.subr.bf16.mxu0 0
    %931 = vmatpush1.bf16.msra.mxu0 %v662
    %932 = vmatprep.subr.bf16.mxu0 0
    %933 = vmatpush1.bf16.msra.mxu0 %v665
    %934 = vmatprep.subr.bf16.mxu0 0
    %935 = vmatpush1.bf16.msra.mxu0 %v668
    %936 = vmatprep.subr.bf16.mxu0 0
    %937 = vmatpush1.bf16.msra.mxu0 %v671
    %938 = vmatprep.subr.bf16.mxu0 0
    %939 = vmatpush1.bf16.msra.mxu0 %v674
    %940 = vmatprep.subr.bf16.mxu0 0
    %941 = vmatpush1.bf16.msra.mxu0 %v677
    %942 = vmatprep.subr.bf16.mxu0 0
    %943 = vmatpush1.bf16.msra.mxu0 %v680
    %944 = vmatprep.subr.bf16.mxu0 0
    %945 = vmatpush1.bf16.msra.mxu0 %v683
    %946 = vmatprep.subr.bf16.mxu0 0
    %947 = vmatpush1.bf16.msra.mxu0 %v686
    %948 = vmatprep.subr.bf16.mxu0 0
    %949 = vmatpush1.bf16.msra.mxu0 %v689
    %950 = vmatprep.subr.bf16.mxu0 0
    %951 = vmatpush1.bf16.msra.mxu0 %v692
    %952 = vmatprep.subr.bf16.mxu0 0
    %953 = vmatpush1.bf16.msra.mxu0 %v695
    %954 = vmatprep.mubr.bf16.mxu0 %v180
    %955 = vmatmul.mubr.bf16.gmra.mrb[0].mxu0 %v179
    %v956 = vpop.f32.mrb[0].mxu0
    %v957 = vadd.f32 %v324, %v956
    %v958 = vpop.f32.mrb[0].mxu0
    %v959 = vpop.f32.mrb[0].mxu0
    %v960 = vpop.f32.mrb[0].mxu0
    %961 = vdwg.mxu0
    %962 = vmatprep.subr.bf16.mxu0 0
    %963 = vmatpush1.bf16.msra.mxu0 %v698
    %964 = vmatprep.subr.bf16.mxu0 0
    %965 = vmatpush1.bf16.msra.mxu0 %v701
    %966 = vmatprep.subr.bf16.mxu0 0
    %967 = vmatpush1.bf16.msra.mxu0 %v704
    %968 = vmatprep.subr.bf16.mxu0 0
    %969 = vmatpush1.bf16.msra.mxu0 %v707
    %970 = vmatprep.subr.bf16.mxu0 0
    %971 = vmatpush1.bf16.msra.mxu0 %v710
    %972 = vmatprep.subr.bf16.mxu0 0
    %973 = vmatpush1.bf16.msra.mxu0 %v713
    %974 = vmatprep.subr.bf16.mxu0 0
    %975 = vmatpush1.bf16.msra.mxu0 %v716
    %976 = vmatprep.subr.bf16.mxu0 0
    %977 = vmatpush1.bf16.msra.mxu0 %v719
    %978 = vmatprep.subr.bf16.mxu0 0
    %979 = vmatpush1.bf16.msra.mxu0 %v722
    %980 = vmatprep.subr.bf16.mxu0 0
    %981 = vmatpush1.bf16.msra.mxu0 %v725
    %982 = vmatprep.subr.bf16.mxu0 0
    %983 = vmatpush1.bf16.msra.mxu0 %v728
    %984 = vmatprep.subr.bf16.mxu0 0
    %985 = vmatpush1.bf16.msra.mxu0 %v731
    %986 = vmatprep.subr.bf16.mxu0 0
    %987 = vmatpush1.bf16.msra.mxu0 %v734
    %988 = vmatprep.subr.bf16.mxu0 0
    %989 = vmatpush1.bf16.msra.mxu0 %v737
    %990 = vmatprep.subr.bf16.mxu0 0
    %991 = vmatpush1.bf16.msra.mxu0 %v740
    %992 = vmatprep.subr.bf16.mxu0 0
    %993 = vmatpush1.bf16.msra.mxu0 %v743
    %994 = vmatprep.mubr.bf16.mxu0 %v182
    %995 = vmatmul.mubr.bf16.gmra.mrb[0].mxu0 %v181
    %v996 = vpop.f32.mrb[0].mxu0
    %v997 = vadd.f32 %v957, %v996
    %v998 = vpop.f32.mrb[0].mxu0
    %v999 = vpop.f32.mrb[0].mxu0
    %v1000 = vpop.f32.mrb[0].mxu0
    %1001 = vdwg.mxu0
    %v1002 = vmax.f32 %v916, 0.0
    %v1003 = vmax.f32 %v918, 0.0
    %v1004 = vmax.f32 %v997, 0.0
    %v1005 = vld [vmem:[%s5] sm:$0xff]
    %v1006 = vld [vmem:[%s5 + $0x8] sm:$0xff]
    %v1007 = vld [vmem:[%s5 + $0x10] sm:$0xff]
    %v1008 = vld [vmem:[%s5 + $0x18] sm:$0xff]
    %v1009 = vld [vmem:[%s5 + $0x20] sm:$0xff]
    %v1010 = vld [vmem:[%s5 + $0x28] sm:$0xff]
    %v1011 = vld [vmem:[%s5 + $0x30] sm:$0xff]
    %v1012 = vld [vmem:[%s5 + $0x38] sm:$0xff]
    %v1013 = vld [vmem:[%s5 + $0x40] sm:$0xff]
    %v1014 = vld [vmem:[%s5 + $0x48] sm:$0xff]
    %v1015 = vld [vmem:[%s5 + $0x50] sm:$0xff]
    %v1016 = vld [vmem:[%s5 + $0x58] sm:$0xff]
    %v1017 = vld [vmem:[%s5 + $0x60] sm:$0xff]
    %v1018 = vld [vmem:[%s5 + $0x68] sm:$0xff]
    %v1019 = vld [vmem:[%s5 + $0x70] sm:$0xff]
    %v1020 = vld [vmem:[%s5 + $0x78] sm:$0xff]
    %v1021 = vld [vmem:[%s5 + $0x80] sm:$0xff]
    %v1022 = vld [vmem:[%s5 + $0x88] sm:$0xff]
    %v1023 = vld [vmem:[%s5 + $0x90] sm:$0xff]
    %v1024 = vld [vmem:[%s5 + $0x98] sm:$0xff]
    %v1025 = vld [vmem:[%s5 + $0xa0] sm:$0xff]
    %v1026 = vld [vmem:[%s5 + $0xa8] sm:$0xff]
    %v1027 = vld [vmem:[%s5 + $0xb0] sm:$0xff]
    %v1028 = vld [vmem:[%s5 + $0xb8] sm:$0xff]
    %v1029 = vld [vmem:[%s5 + $0xc0] sm:$0xff]
    %v1030 = vld [vmem:[%s5 + $0xc8] sm:$0xff]
    %v1031 = vld [vmem:[%s5 + $0xd0] sm:$0xff]
    %v1032 = vld [vmem:[%s5 + $0xd8] sm:$0xff]
    %v1033 = vld [vmem:[%s5 + $0xe0] sm:$0xff]
    %v1034 = vld [vmem:[%s5 + $0xe8] sm:$0xff]
    %v1035 = vld [vmem:[%s5 + $0xf0] sm:$0xff]
    %v1036 = vld [vmem:[%s5 + $0xf8] sm:$0xff]
    %v1037 = vld [vmem:[%s5 + $0x100] sm:$0xff]
    %v1038 = vld [vmem:[%s5 + $0x108] sm:$0xff]
    %v1039 = vld [vmem:[%s5 + $0x110] sm:$0xff]
    %v1040 = vld [vmem:[%s5 + $0x118] sm:$0xff]
    %v1041 = vld [vmem:[%s5 + $0x120] sm:$0xff]
    %v1042 = vld [vmem:[%s5 + $0x128] sm:$0xff]
    %v1043 = vld [vmem:[%s5 + $0x130] sm:$0xff]
    %v1044 = vld [vmem:[%s5 + $0x138] sm:$0xff]
    %v1045 = vld [vmem:[%s5 + $0x140] sm:$0xff]
    %v1046 = vld [vmem:[%s5 + $0x148] sm:$0xff]
    %v1047 = vld [vmem:[%s5 + $0x150] sm:$0xff]
    %v1048 = vld [vmem:[%s5 + $0x158] sm:$0xff]
    %v1049 = vld [vmem:[%s5 + $0x160] sm:$0xff]
    %v1050 = vld [vmem:[%s5 + $0x168] sm:$0xff]
    %v1051 = vld [vmem:[%s5 + $0x170] sm:$0xff]
    %v1052 = vld [vmem:[%s5 + $0x178] sm:$0xff]
    %v1053 = vld [vmem:[%s6] sm:$0x1]
    %v1055 = vlaneseq
    %v1056 = vshrl.u32 %v1055, 7
    %v1057 = vsub.s32 0, %v1056
    %v1058 = vrot.slane %v1053, %v1057
    %1060 = vmatprep.subr.mxu0 0.0
    %1061 = vmatpush1.msra.mxu0 %v1005
    %1062 = vmatprep.subr.mxu0 0.0
    %1063 = vmatpush1.msra.mxu0 %v1006
    %1064 = vmatprep.subr.mxu0 0.0
    %1065 = vmatpush1.msra.mxu0 %v1007
    %1066 = vmatprep.subr.mxu0 0.0
    %1067 = vmatpush1.msra.mxu0 %v1008
    %1068 = vmatprep.subr.mxu0 0.0
    %1069 = vmatpush1.msra.mxu0 %v1009
    %1070 = vmatprep.subr.mxu0 0.0
    %1071 = vmatpush1.msra.mxu0 %v1010
    %1072 = vmatprep.subr.mxu0 0.0
    %1073 = vmatpush1.msra.mxu0 %v1011
    %1074 = vmatprep.subr.mxu0 0.0
    %1075 = vmatpush1.msra.mxu0 %v1012
    %1076 = vmatprep.subr.mxu0 0.0
    %1077 = vmatpush1.msra.mxu0 %v1013
    %1078 = vmatprep.subr.mxu0 0.0
    %1079 = vmatpush1.msra.mxu0 %v1014
    %1080 = vmatprep.subr.mxu0 0.0
    %1081 = vmatpush1.msra.mxu0 %v1015
    %1082 = vmatprep.subr.mxu0 0.0
    %1083 = vmatpush1.msra.mxu0 %v1016
    %1084 = vmatprep.subr.mxu0 0.0
    %1085 = vmatpush1.msra.mxu0 %v1017
    %1086 = vmatprep.subr.mxu0 0.0
    %1087 = vmatpush1.msra.mxu0 %v1018
    %1088 = vmatprep.subr.mxu0 0.0
    %1089 = vmatpush1.msra.mxu0 %v1019
    %1090 = vmatprep.subr.mxu0 0.0
    %1091 = vmatpush1.msra.mxu0 %v1020
    %1092 = vmatprep.subr.mxu0 0.0
    %1093 = vmatpush1.msra.mxu0 %v1021
    %1094 = vmatprep.subr.mxu0 0.0
    %1095 = vmatpush1.msra.mxu0 %v1022
    %1096 = vmatprep.subr.mxu0 0.0
    %1097 = vmatpush1.msra.mxu0 %v1023
    %1098 = vmatprep.subr.mxu0 0.0
    %1099 = vmatpush1.msra.mxu0 %v1024
    %1100 = vmatprep.subr.mxu0 0.0
    %1101 = vmatpush1.msra.mxu0 %v1025
    %1102 = vmatprep.subr.mxu0 0.0
    %1103 = vmatpush1.msra.mxu0 %v1026
    %1104 = vmatprep.subr.mxu0 0.0
    %1105 = vmatpush1.msra.mxu0 %v1027
    %1106 = vmatprep.subr.mxu0 0.0
    %1107 = vmatpush1.msra.mxu0 %v1028
    %1108 = vmatprep.subr.mxu0 0.0
    %1109 = vmatpush1.msra.mxu0 %v1029
    %1110 = vmatprep.subr.mxu0 0.0
    %1111 = vmatpush1.msra.mxu0 %v1030
    %1112 = vmatprep.subr.mxu0 0.0
    %1113 = vmatpush1.msra.mxu0 %v1031
    %1114 = vmatprep.subr.mxu0 0.0
    %1115 = vmatpush1.msra.mxu0 %v1032
    %1116 = vmatprep.subr.mxu0 0.0
    %1117 = vmatpush1.msra.mxu0 %v1033
    %1118 = vmatprep.subr.mxu0 0.0
    %1119 = vmatpush1.msra.mxu0 %v1034
    %1120 = vmatprep.subr.mxu0 0.0
    %1121 = vmatpush1.msra.mxu0 %v1035
    %1122 = vmatprep.subr.mxu0 0.0
    %1123 = vmatpush1.msra.mxu0 %v1036
    %1124 = vmatprep.mubr.f32.mxu0 %v1003
    %1125 = vmatmul.mubr.f32.gmra.mrb[0].mxu0 %v1002
    %v1126 = vpop.f32.mrb[0].mxu0
    %v1127 = vadd.f32 %v1058, %v1126
    %v1128 = vpop.f32.mrb[0].mxu0
    %1129 = vdwg.mxu0
    %1130 = vmatprep.subr.mxu0 0.0
    %1131 = vmatpush1.msra.mxu0 %v1037
    %1132 = vmatprep.subr.mxu0 0.0
    %1133 = vmatpush1.msra.mxu0 %v1038
    %1134 = vmatprep.subr.mxu0 0.0
    %1135 = vmatpush1.msra.mxu0 %v1039
    %1136 = vmatprep.subr.mxu0 0.0
    %1137 = vmatpush1.msra.mxu0 %v1040
    %1138 = vmatprep.subr.mxu0 0.0
    %1139 = vmatpush1.msra.mxu0 %v1041
    %1140 = vmatprep.subr.mxu0 0.0
    %1141 = vmatpush1.msra.mxu0 %v1042
    %1142 = vmatprep.subr.mxu0 0.0
    %1143 = vmatpush1.msra.mxu0 %v1043
    %1144 = vmatprep.subr.mxu0 0.0
    %1145 = vmatpush1.msra.mxu0 %v1044
    %1146 = vmatprep.subr.mxu0 0.0
    %1147 = vmatpush1.msra.mxu0 %v1045
    %1148 = vmatprep.subr.mxu0 0.0
    %1149 = vmatpush1.msra.mxu0 %v1046
    %1150 = vmatprep.subr.mxu0 0.0
    %1151 = vmatpush1.msra.mxu0 %v1047
    %1152 = vmatprep.subr.mxu0 0.0
    %1153 = vmatpush1.msra.mxu0 %v1048
    %1154 = vmatprep.subr.mxu0 0.0
    %1155 = vmatpush1.msra.mxu0 %v1049
    %1156 = vmatprep.subr.mxu0 0.0
    %1157 = vmatpush1.msra.mxu0 %v1050
    %1158 = vmatprep.subr.mxu0 0.0
    %1159 = vmatpush1.msra.mxu0 %v1051
    %1160 = vmatprep.subr.mxu0 0.0
    %1161 = vmatpush1.msra.mxu0 %v1052
    %1162 = vmatprep.subr.mxu0 0.0
    %1163 = vmatpush1.msra.mxu0 0.0
    %1164 = vmatprep.subr.mxu0 0.0
    %1165 = vmatpush1.msra.mxu0 0.0
    %1166 = vmatprep.subr.mxu0 0.0
    %1167 = vmatpush1.msra.mxu0 0.0
    %1168 = vmatprep.subr.mxu0 0.0
    %1169 = vmatpush1.msra.mxu0 0.0
    %1170 = vmatprep.subr.mxu0 0.0
    %1171 = vmatpush1.msra.mxu0 0.0
    %1172 = vmatprep.subr.mxu0 0.0
    %1173 = vmatpush1.msra.mxu0 0.0
    %1174 = vmatprep.subr.mxu0 0.0
    %1175 = vmatpush1.msra.mxu0 0.0
    %1176 = vmatprep.subr.mxu0 0.0
    %1177 = vmatpush1.msra.mxu0 0.0
    %1178 = vmatprep.subr.mxu0 0.0
    %1179 = vmatpush1.msra.mxu0 0.0
    %1180 = vmatprep.subr.mxu0 0.0
    %1181 = vmatpush1.msra.mxu0 0.0
    %1182 = vmatprep.subr.mxu0 0.0
    %1183 = vmatpush1.msra.mxu0 0.0
    %1184 = vmatprep.subr.mxu0 0.0
    %1185 = vmatpush1.msra.mxu0 0.0
    %1186 = vmatprep.subr.mxu0 0.0
    %1187 = vmatpush1.msra.mxu0 0.0
    %1188 = vmatprep.subr.mxu0 0.0
    %1189 = vmatpush1.msra.mxu0 0.0
    %1190 = vmatprep.subr.mxu0 0.0
    %1191 = vmatpush1.msra.mxu0 0.0
    %1192 = vmatprep.subr.mxu0 0.0
    %1193 = vmatpush1.msra.mxu0 0.0
    %1194 = vmatprep.mubr.f32.mxu0 0.0
    %1195 = vmatmul.mubr.f32.gmra.mrb[0].mxu0 %v1004
    %v1196 = vpop.f32.mrb[0].mxu0
    %v1197 = vadd.f32 %v1127, %v1196
    %v1198 = vpop.f32.mrb[0].mxu0
    %1199 = vdwg.mxu0
    %v1200 = vtanh.pop %v1197
    %v1201 = vmul.f32 %v1200, 2.0
    %v1202 = vadd.f32 %v1201, 0.0
    %vm1203 = vcmask 31744
    %1204 = vst.msk [vmem:[%s7] sm:$0xff] %vm1203, %v1202
    // Predicated region
    $region34: #{tpu_custom_call.1} parent=1 // pred_check
      _
    $region35: #{tpu_custom_call.1} parent=1 // pred_check_branch
      %1206 = sbr.rel (0) target = $region37
    $region36: #{tpu_custom_call.1} parent=1 // pred_region
      _
    $region37: #{tpu_custom_call.1} parent=1 // pred_fallthru
      _
    // Predicated region
    $region38: #{tpu_custom_call.1} parent=1 // pred_check
      _
    $region39: #{tpu_custom_call.1} parent=1 // pred_check_branch
      %1208 = sbr.rel (0) target = $region41
    $region40: #{tpu_custom_call.1} parent=1 // pred_region
      _
    $region41: #{tpu_custom_call.1} parent=1 // pred_fallthru
      _
    %1209 = vsyncpa [#allocation3], 1

</llo_original>
